<compile_context>
chip_gen: v5e
topology: v5e:2x2
jax: 0.10.0
libtpu: 0.0.40
codegen_flags: <defaults>
</compile_context>

<pallas_src>
import jax
import jax.numpy as jnp
from jax.experimental import pallas as pl
from jax.experimental.pallas import tpu as pltpu

_LANES = 128  # pad channel / class axes to a full lane width


def _fused_forward_kernel(p_ref, wc_ref, bc_ref, wf_ref, bf_ref,
                          feat_ref, logit_ref):
    """conv-as-one-matmul + bias + ReLU + avg-pool (sublane sum) + classifier.

    p_ref     : [TB*H*W, K]  bf16 im2col patch matrix (K = 9*Cin)
    wc_ref    : [K, 128]     bf16 conv weight, Cout zero-padded to 128 lanes
    bc_ref    : [1, 128]     f32 conv bias (padded)
    wf_ref    : [128, 128]   bf16 classifier weight (Cout x NCLS, zero-padded)
    bf_ref    : [1, 128]     f32 classifier bias (padded)
    feat_ref  : [TB, 128]    f32 pooled features (padded lanes are 0)
    logit_ref : [TB, 128]    f32 logits (padded lanes are 0)
    """
    rows = p_ref.shape[0]
    tb, cp = feat_ref.shape
    hw = rows // tb

    # Conv3x3 folded into ONE MXU matmul (bf16 operands, f32 accumulation).
    acc = jnp.dot(p_ref[...], wc_ref[...], preferred_element_type=jnp.float32)
    acc = jnp.maximum(acc + bc_ref[...], 0.0)          # bias + ReLU in f32

    # Global average pool per image: layout-preserving reshape (hw is a
    # multiple of the sublane tile) + sublane reduce.  Linear cost in tb, no
    # per-step mask construction, and the MXU stays free for the matmuls.
    feat = jnp.sum(acc.reshape(tb, hw, cp), axis=1) * (1.0 / hw)
    feat_ref[...] = feat.astype(feat_ref.dtype)

    # Classifier head: logits = feat @ W^T + b (bf16 matmul, f32 accumulate).
    # Note: logits use feat rounded to bf16 while the returned feature stays
    # f32 — within the stated mixed-precision tolerance.
    logits = jnp.dot(feat.astype(jnp.bfloat16), wf_ref[...],
                     preferred_element_type=jnp.float32) + bf_ref[...]
    logit_ref[...] = logits.astype(logit_ref.dtype)


def model_wrapper_forward(x_nchw, conv_w, conv_b, fc_w, fc_b, *, tb=None):
    """Fused Pallas forward.

    x_nchw : [B, Cin, H, W]     (PyTorch NCHW convention)
    conv_w : [Cout, Cin, 3, 3]  (PyTorch Conv2d OIHW)
    conv_b : [Cout]
    fc_w   : [NCLS, Cout]       (PyTorch Linear convention)
    fc_b   : [NCLS]
    returns {'logit': [B, NCLS], 'feature': [B, Cout]}   (eval-mode output)
    """
    B, Cin, H, W = x_nchw.shape
    Cout = conv_w.shape[0]
    ncls = fc_w.shape[0]
    K = 9 * Cin
    CP = _LANES
    hw = H * W
    assert Cout <= CP and ncls <= CP

    # Batch tile.  Default 32 pooled-output rows per grid step (sweep: v6e has
    # VMEM headroom for 128+, cap around 64 on v7x's 64 MiB VMEM).  Small
    # batches run as a single block; larger batches are zero-padded to a
    # multiple of tb so tiling is always well-formed and v7x gets >=2 grid
    # steps whenever B > tb.
    if tb is None:
        tb = 32
    if B <= tb:
        tb = B                       # single block (block == full array dim)
        B_pad = B
    else:
        tb = max((tb // 8) * 8, 8)   # keep the (8,128) store-tile constraint
        B_pad = -(-B // tb) * tb
    nb = B_pad // tb
    rows_per_block = tb * hw

    # ---- XLA-side glue: layout, zero-pad, im2col, weight/bias packing ----
    x = x_nchw.astype(jnp.float32)
    if B_pad != B:
        x = jnp.pad(x, ((0, B_pad - B), (0, 0), (0, 0), (0, 0)))
    x = jnp.transpose(x, (0, 2, 3, 1))                                 # NHWC
    xp = jnp.pad(x, ((0, 0), (1, 1), (1, 1), (0, 0)))                  # pad=1
    taps = [xp[:, kh:kh + H, kw:kw + W, :]
            for kh in range(3) for kw in range(3)]
    patches = jnp.concatenate(taps, axis=-1)                           # [B,H,W,9*Cin]
    patches = patches.reshape(B_pad * hw, K).astype(jnp.bfloat16)      # lane-dense

    wc = jnp.transpose(conv_w, (2, 3, 1, 0)).reshape(K, Cout)          # OIHW->HWIO->[K,Cout]
    wc = jnp.pad(wc, ((0, 0), (0, CP - Cout))).astype(jnp.bfloat16)
    bc = jnp.pad(conv_b, (0, CP - Cout)).reshape(1, CP).astype(jnp.float32)
    wf = jnp.pad(fc_w.T, ((0, CP - Cout), (0, CP - ncls))).astype(jnp.bfloat16)
    bf = jnp.pad(fc_b, (0, CP - ncls)).reshape(1, CP).astype(jnp.float32)

    grid_spec = pltpu.PrefetchScalarGridSpec(
        num_scalar_prefetch=0,
        grid=(nb,),
        in_specs=[
            # Patches: the only block that moves per step.  If xprof shows
            # exposed DMA at large tb, add pipeline_mode=pl.Buffered(3) here.
            pl.BlockSpec((rows_per_block, K), lambda b: (b, 0)),
            pl.BlockSpec((K, CP), lambda b: (0, 0)),               # conv weight
            pl.BlockSpec((1, CP), lambda b: (0, 0)),               # conv bias
            pl.BlockSpec((CP, CP), lambda b: (0, 0)),              # fc weight
            pl.BlockSpec((1, CP), lambda b: (0, 0)),               # fc bias
        ],
        out_specs=(
            pl.BlockSpec((tb, CP), lambda b: (b, 0)),              # features
            pl.BlockSpec((tb, CP), lambda b: (b, 0)),              # logits
        ),
    )

    feat_pad, logit_pad = pl.pallas_call(
        _fused_forward_kernel,
        out_shape=(
            jax.ShapeDtypeStruct((B_pad, CP), jnp.float32),
            jax.ShapeDtypeStruct((B_pad, CP), jnp.float32),
        ),
        grid_spec=grid_spec,
        compiler_params=pltpu.CompilerParams(
            dimension_semantics=("parallel",),       # megacore-shardable batch axis
            vmem_limit_bytes=48 * 1024 * 1024,       # headroom under v7x 64 MiB
        ),
    )(patches, wc, bc, wf, bf)

    # Slice batch + lane padding back off (cheap XLA slices).
    return {'logit': logit_pad[:B, :ncls], 'feature': feat_pad[:B, :Cout]}


def _reference_forward(x_nchw, conv_w, conv_b, fc_w, fc_b):
    """Pure-JAX f32 reference (module semantics) for correctness checking."""
    y = jax.lax.conv_general_dilated(
        x_nchw.astype(jnp.float32), conv_w.astype(jnp.float32),
        window_strides=(1, 1), padding=((1, 1), (1, 1)),
        dimension_numbers=('NCHW', 'OIHW', 'NCHW'))
    y = y + conv_b[None, :, None, None]
    y = jnp.maximum(y, 0.0)
    feat = y.mean(axis=(2, 3))                      # [B, Cout]
    logit = feat @ fc_w.T + fc_b[None, :]
    return {'logit': logit, 'feature': feat}


# TODO(synk): host-side ModelWrapper utilities (set_grads, load_model,
# convert_state_dict) and the training-mode branch (bare-logit return /
# dropout behaviour) have no kernel equivalent; only the eval forward path is
# implemented.

if __name__ == "__main__":
    B, Cin, H, W = 2, 4, 16, 16
    Cout, NCLS = 32, 10

    key = jax.random.PRNGKey(0)
    kx, kcw, kcb, kfw, kfb = jax.random.split(key, 5)

    x = jax.random.normal(kx, (B, Cin, H, W), jnp.float32)
    conv_w = jax.random.normal(kcw, (Cout, Cin, 3, 3), jnp.float32) * 0.1
    conv_b = jax.random.normal(kcb, (Cout,), jnp.float32) * 0.1
    fc_w = jax.random.normal(kfw, (NCLS, Cout), jnp.float32) * 0.1
    fc_b = jax.random.normal(kfb, (NCLS,), jnp.float32) * 0.1

    out = model_wrapper_forward(x, conv_w, conv_b, fc_w, fc_b)
    jax.block_until_ready(out)

    ref = _reference_forward(x, conv_w, conv_b, fc_w, fc_b)
    # bf16 matmul operands (f32 accumulation) -> compare against the f32
    # reference with a mixed-precision-appropriate tolerance.
    assert jnp.allclose(out['feature'], ref['feature'], atol=3e-2, rtol=3e-2), \
        float(jnp.max(jnp.abs(out['feature'] - ref['feature'])))
    assert jnp.allclose(out['logit'], ref['logit'], atol=3e-2, rtol=3e-2), \
        float(jnp.max(jnp.abs(out['logit'] - ref['logit'])))

    print("KERNEL_OK")
</pallas_src>

<mosaic_0001>
module attributes {stable_mosaic.version = 11 : i64} {
  func.func @_fused_forward_kernel(%arg0: i32, %arg1: memref<512x36xbf16, #tpu.memory_space<vmem>>, %arg2: memref<36x128xbf16, #tpu.memory_space<vmem>>, %arg3: memref<1x128xf32, #tpu.memory_space<vmem>>, %arg4: memref<128x128xbf16, #tpu.memory_space<vmem>>, %arg5: memref<1x128xf32, #tpu.memory_space<vmem>>, %arg6: memref<2x128xf32, #tpu.memory_space<vmem>>, %arg7: memref<2x128xf32, #tpu.memory_space<vmem>>) attributes {dimension_semantics = [#tpu.dimension_semantics<parallel>], iteration_bounds = array<i64: 1>, scalar_prefetch = 0 : i64, scratch_operands = 0 : i64, tpu.core_type = #tpu.core_type<tc>, window_params = [{transform_indices = @transform_0, window_bounds = array<i64: 512, 36>}, {pipeline_mode = #tpu.pipeline_mode<synchronous>, transform_indices = @transform_1, window_bounds = array<i64: 36, 128>}, {pipeline_mode = #tpu.pipeline_mode<synchronous>, transform_indices = @transform_2, window_bounds = array<i64: 1, 128>}, {pipeline_mode = #tpu.pipeline_mode<synchronous>, transform_indices = @transform_3, window_bounds = array<i64: 128, 128>}, {pipeline_mode = #tpu.pipeline_mode<synchronous>, transform_indices = @transform_4, window_bounds = array<i64: 1, 128>}, {transform_indices = @transform_5, window_bounds = array<i64: 2, 128>}, {transform_indices = @transform_6, window_bounds = array<i64: 2, 128>}]} {
    %c0 = arith.constant 0 : index
    %c0_0 = arith.constant 0 : index
    %0 = vector.load %arg1[%c0, %c0_0] : memref<512x36xbf16, #tpu.memory_space<vmem>>, vector<512x36xbf16>
    %c0_1 = arith.constant 0 : index
    %c0_2 = arith.constant 0 : index
    %1 = vector.load %arg2[%c0_1, %c0_2] : memref<36x128xbf16, #tpu.memory_space<vmem>>, vector<36x128xbf16>
    %cst = arith.constant dense<0.000000e+00> : vector<512x128xf32>
    %2 = tpu.matmul %0, %1, %cst {dimension_numbers = #tpu.dot_dimension_numbers<[1], [0], [0], [1], [0, 0, 1, 1], [], []>} : vector<512x36xbf16>, vector<36x128xbf16>, vector<512x128xf32> -> vector<512x128xf32>
    %c0_3 = arith.constant 0 : index
    %c0_4 = arith.constant 0 : index
    %3 = vector.load %arg3[%c0_3, %c0_4] : memref<1x128xf32, #tpu.memory_space<vmem>>, vector<1x128xf32>
    %4 = vector.broadcast %3 : vector<1x128xf32> to vector<512x128xf32>
    %5 = arith.addf %2, %4 : vector<512x128xf32>
    %cst_5 = arith.constant 0.000000e+00 : f32
    %6 = vector.broadcast %cst_5 : f32 to vector<512x128xf32>
    %7 = arith.maximumf %5, %6 : vector<512x128xf32>
    %8 = vector.shape_cast %7 : vector<512x128xf32> to vector<2x256x128xf32>
    %cst_6 = arith.constant dense<0.000000e+00> : vector<2x128xf32>
    %9 = vector.multi_reduction <add>, %8, %cst_6 [1] : vector<2x256x128xf32> to vector<2x128xf32>
    %cst_7 = arith.constant 3.906250e-03 : f32
    %10 = vector.broadcast %cst_7 : f32 to vector<2x128xf32>
    %11 = arith.mulf %9, %10 : vector<2x128xf32>
    %c0_8 = arith.constant 0 : index
    %c0_9 = arith.constant 0 : index
    %12 = vector.load %arg6[%c0_8, %c0_9] : memref<2x128xf32, #tpu.memory_space<vmem>>, vector<2x128xf32>
    tpu.vector_store %arg6[%c0_8, %c0_9], %11 {strides = array<i32>} : memref<2x128xf32, #tpu.memory_space<vmem>>, vector<2x128xf32>,
    %13 = arith.truncf %11 : vector<2x128xf32> to vector<2x128xbf16>
    %c0_10 = arith.constant 0 : index
    %c0_11 = arith.constant 0 : index
    %14 = vector.load %arg4[%c0_10, %c0_11] : memref<128x128xbf16, #tpu.memory_space<vmem>>, vector<128x128xbf16>
    %cst_12 = arith.constant dense<0.000000e+00> : vector<2x128xf32>
    %15 = tpu.matmul %13, %14, %cst_12 {dimension_numbers = #tpu.dot_dimension_numbers<[1], [0], [0], [1], [0, 0, 1, 1], [], []>} : vector<2x128xbf16>, vector<128x128xbf16>, vector<2x128xf32> -> vector<2x128xf32>
    %c0_13 = arith.constant 0 : index
    %c0_14 = arith.constant 0 : index
    %16 = vector.load %arg5[%c0_13, %c0_14] : memref<1x128xf32, #tpu.memory_space<vmem>>, vector<1x128xf32>
    %17 = vector.broadcast %16 : vector<1x128xf32> to vector<2x128xf32>
    %18 = arith.addf %15, %17 : vector<2x128xf32>
    %c0_15 = arith.constant 0 : index
    %c0_16 = arith.constant 0 : index
    %19 = vector.load %arg7[%c0_15, %c0_16] : memref<2x128xf32, #tpu.memory_space<vmem>>, vector<2x128xf32>
    tpu.vector_store %arg7[%c0_15, %c0_16], %18 {strides = array<i32>} : memref<2x128xf32, #tpu.memory_space<vmem>>, vector<2x128xf32>,
    return
  }
  func.func @transform_0(%arg0: i32) -> (i32, i32) {
    %c0_i32 = arith.constant 0 : i32
    %c0_i32_0 = arith.constant 0 : i32
    return %arg0, %c0_i32 : i32, i32
  }
  func.func @transform_1(%arg0: i32) -> (i32, i32) {
    %c0_i32 = arith.constant 0 : i32
    %c0_i32_0 = arith.constant 0 : i32
    %c0_i32_1 = arith.constant 0 : i32
    return %c0_i32, %c0_i32_0 : i32, i32
  }
  func.func @transform_2(%arg0: i32) -> (i32, i32) {
    %c0_i32 = arith.constant 0 : i32
    %c0_i32_0 = arith.constant 0 : i32
    %c0_i32_1 = arith.constant 0 : i32
    return %c0_i32, %c0_i32_0 : i32, i32
  }
  func.func @transform_3(%arg0: i32) -> (i32, i32) {
    %c0_i32 = arith.constant 0 : i32
    %c0_i32_0 = arith.constant 0 : i32
    %c0_i32_1 = arith.constant 0 : i32
    return %c0_i32, %c0_i32_0 : i32, i32
  }
  func.func @transform_4(%arg0: i32) -> (i32, i32) {
    %c0_i32 = arith.constant 0 : i32
    %c0_i32_0 = arith.constant 0 : i32
    %c0_i32_1 = arith.constant 0 : i32
    return %c0_i32, %c0_i32_0 : i32, i32
  }
  func.func @transform_5(%arg0: i32) -> (i32, i32) {
    %c0_i32 = arith.constant 0 : i32
    %c0_i32_0 = arith.constant 0 : i32
    return %arg0, %c0_i32 : i32, i32
  }
  func.func @transform_6(%arg0: i32) -> (i32, i32) {
    %c0_i32 = arith.constant 0 : i32
    %c0_i32_0 = arith.constant 0 : i32
    return %arg0, %c0_i32 : i32, i32
  }
}

</mosaic_0001>

<llo_original>
// kernel: tpu_custom_call.1
$region0: #{tpu_custom_call.1}
  #allocation0 [shape = 'u32[]', space=smem, size = 0x4, offset = 0x4, fixed_abs, tag = 'smem constant byte address 0x4 - core index']
  #allocation1 [shape = 'u32[72,128]{1,0:T(1,128)}', space=vmem, size = 0x9000, scoped, tag = 'internal scratch']
  %s0 = inlined_call_operand.vmem [shape: bf16[512,36], index: 0, kind: input, shape index: {}]
  %s1 = inlined_call_operand.vmem [shape: bf16[36,128], index: 1, kind: input, shape index: {}]
  %s2 = inlined_call_operand.vmem [shape: f32[1,128], index: 2, kind: input, shape index: {}]
  %s3 = inlined_call_operand.vmem [shape: bf16[128,128], index: 3, kind: input, shape index: {}]
  %s4 = inlined_call_operand.vmem [shape: f32[1,128], index: 4, kind: input, shape index: {}]
  %s5 = inlined_call_operand.hbm [shape: f32[2,128], index: 5, kind: output, shape index: {0}]
  %s6 = inlined_call_operand.hbm [shape: f32[2,128], index: 6, kind: output, shape index: {1}]
  %7 = xla_tuple %s5, %s6
  %s8 = sld [smem:[#allocation0]]
  $region38: #{tpu_custom_call.1} parent=0
    _
  %s10 = ssub.s32 1, %s8
  %s11 = scalar_select 0, %s10, %s8
  $region1: #{tpu_custom_call.1} parent=0
    #allocation2 [shape = 'u8[1024]{0}', space=vmem, size = 0x400, scoped, tag = 'output window, operand 0, single buffered']
    #allocation3 [shape = 's32[1]{0}', space=sflag, size = 0x4, scoped, tag = 'scoped memory for tpu_custom_call.1']
    #allocation4 [shape = 'u8[1024]{0}', space=vmem, size = 0x400, scoped, tag = 'output window, operand 1, single buffered']
    #allocation5 [shape = 's32[1]{0}', space=sflag, size = 0x4, scoped, tag = 'scoped memory for tpu_custom_call.1']
    %12 = vsyncpa [#allocation3], 0
    %13 = vsyncpa [#allocation5], 0
    // Predicated region
    $region2: #{tpu_custom_call.1} parent=1 // pred_check
      _
    $region3: #{tpu_custom_call.1} parent=1 // pred_check_branch
      %15 = sbr.rel (0) target = $region5
    $region4: #{tpu_custom_call.1} parent=1 // pred_region
      _
    $region5: #{tpu_custom_call.1} parent=1 // pred_fallthru
      _
    // Predicated region
    $region6: #{tpu_custom_call.1} parent=1 // pred_check
      _
    $region7: #{tpu_custom_call.1} parent=1 // pred_check_branch
      %17 = sbr.rel (0) target = $region9
    $region8: #{tpu_custom_call.1} parent=1 // pred_region
      _
    $region9: #{tpu_custom_call.1} parent=1 // pred_fallthru
      _
    // Predicated region
    $region10: #{tpu_custom_call.1} parent=1 // pred_check
      _
    $region11: #{tpu_custom_call.1} parent=1 // pred_check_branch
      %19 = sbr.rel (0) target = $region13
    $region12: #{tpu_custom_call.1} parent=1 // pred_region
      _
    $region13: #{tpu_custom_call.1} parent=1 // pred_fallthru
      _
    // Predicated region
    $region14: #{tpu_custom_call.1} parent=1 // pred_check
      _
    $region15: #{tpu_custom_call.1} parent=1 // pred_check_branch
      %21 = sbr.rel (0) target = $region17
    $region16: #{tpu_custom_call.1} parent=1 // pred_region
      _
    $region17: #{tpu_custom_call.1} parent=1 // pred_fallthru
      _
    // Predicated region
    $region18: #{tpu_custom_call.1} parent=1 // pred_check
      _
    $region19: #{tpu_custom_call.1} parent=1 // pred_check_branch
      %23 = sbr.rel (0) target = $region21
    $region20: #{tpu_custom_call.1} parent=1 // pred_region
      _
    $region21: #{tpu_custom_call.1} parent=1 // pred_fallthru
      _
    %v25 = vld [vmem:[%s0] sm:$0xf]
    %v26 = vld [vmem:[%s0 + $0x4] sm:$0xf]
    %v27 = vld [vmem:[%s0 + $0x8] sm:$0xf]
    %v28 = vld [vmem:[%s0 + $0xc] sm:$0xf]
    %v29 = vld [vmem:[%s0 + $0x10] sm:$0xf]
    %v30 = vld [vmem:[%s0 + $0x14] sm:$0xf]
    %v31 = vld [vmem:[%s0 + $0x18] sm:$0xf]
    %v32 = vld [vmem:[%s0 + $0x1c] sm:$0xf]
    %v33 = vld [vmem:[%s0 + $0x20] sm:$0xf]
    %v34 = vld [vmem:[%s0 + $0x24] sm:$0xf]
    %v35 = vld [vmem:[%s0 + $0x28] sm:$0xf]
    %v36 = vld [vmem:[%s0 + $0x2c] sm:$0xf]
    %v37 = vld [vmem:[%s0 + $0x30] sm:$0xf]
    %v38 = vld [vmem:[%s0 + $0x34] sm:$0xf]
    %v39 = vld [vmem:[%s0 + $0x38] sm:$0xf]
    %v40 = vld [vmem:[%s0 + $0x3c] sm:$0xf]
    %v41 = vld [vmem:[%s0 + $0x40] sm:$0xf]
    %v42 = vld [vmem:[%s0 + $0x44] sm:$0xf]
    %v43 = vld [vmem:[%s0 + $0x48] sm:$0xf]
    %v44 = vld [vmem:[%s0 + $0x4c] sm:$0xf]
    %v45 = vld [vmem:[%s0 + $0x50] sm:$0xf]
    %v46 = vld [vmem:[%s0 + $0x54] sm:$0xf]
    %v47 = vld [vmem:[%s0 + $0x58] sm:$0xf]
    %v48 = vld [vmem:[%s0 + $0x5c] sm:$0xf]
    %v49 = vld [vmem:[%s0 + $0x60] sm:$0xf]
    %v50 = vld [vmem:[%s0 + $0x64] sm:$0xf]
    %v51 = vld [vmem:[%s0 + $0x68] sm:$0xf]
    %v52 = vld [vmem:[%s0 + $0x6c] sm:$0xf]
    %v53 = vld [vmem:[%s0 + $0x70] sm:$0xf]
    %v54 = vld [vmem:[%s0 + $0x74] sm:$0xf]
    %v55 = vld [vmem:[%s0 + $0x78] sm:$0xf]
    %v56 = vld [vmem:[%s0 + $0x7c] sm:$0xf]
    %v57 = vld [vmem:[%s0 + $0x80] sm:$0xf]
    %v58 = vld [vmem:[%s0 + $0x84] sm:$0xf]
    %v59 = vld [vmem:[%s0 + $0x88] sm:$0xf]
    %v60 = vld [vmem:[%s0 + $0x8c] sm:$0xf]
    %v61 = vld [vmem:[%s0 + $0x90] sm:$0xf]
    %v62 = vld [vmem:[%s0 + $0x94] sm:$0xf]
    %v63 = vld [vmem:[%s0 + $0x98] sm:$0xf]
    %v64 = vld [vmem:[%s0 + $0x9c] sm:$0xf]
    %v65 = vld [vmem:[%s0 + $0xa0] sm:$0xf]
    %v66 = vld [vmem:[%s0 + $0xa4] sm:$0xf]
    %v67 = vld [vmem:[%s0 + $0xa8] sm:$0xf]
    %v68 = vld [vmem:[%s0 + $0xac] sm:$0xf]
    %v69 = vld [vmem:[%s0 + $0xb0] sm:$0xf]
    %v70 = vld [vmem:[%s0 + $0xb4] sm:$0xf]
    %v71 = vld [vmem:[%s0 + $0xb8] sm:$0xf]
    %v72 = vld [vmem:[%s0 + $0xbc] sm:$0xf]
    %v73 = vld [vmem:[%s0 + $0xc0] sm:$0xf]
    %v74 = vld [vmem:[%s0 + $0xc4] sm:$0xf]
    %v75 = vld [vmem:[%s0 + $0xc8] sm:$0xf]
    %v76 = vld [vmem:[%s0 + $0xcc] sm:$0xf]
    %v77 = vld [vmem:[%s0 + $0xd0] sm:$0xf]
    %v78 = vld [vmem:[%s0 + $0xd4] sm:$0xf]
    %v79 = vld [vmem:[%s0 + $0xd8] sm:$0xf]
    %v80 = vld [vmem:[%s0 + $0xdc] sm:$0xf]
    %v81 = vld [vmem:[%s0 + $0xe0] sm:$0xf]
    %v82 = vld [vmem:[%s0 + $0xe4] sm:$0xf]
    %v83 = vld [vmem:[%s0 + $0xe8] sm:$0xf]
    %v84 = vld [vmem:[%s0 + $0xec] sm:$0xf]
    %v85 = vld [vmem:[%s0 + $0xf0] sm:$0xf]
    %v86 = vld [vmem:[%s0 + $0xf4] sm:$0xf]
    %v87 = vld [vmem:[%s0 + $0xf8] sm:$0xf]
    %v88 = vld [vmem:[%s0 + $0xfc] sm:$0xf]
    %v89 = vld [vmem:[%s1] sm:$0xf]
    %v90 = vld [vmem:[%s1 + $0x4] sm:$0xf]
    %v91 = vld [vmem:[%s1 + $0x8] sm:$0xf]
    %v92 = vld [vmem:[%s1 + $0xc] sm:$0xf]
    %v93 = vld [vmem:[%s1 + $0x10] sm:$0x3]
    %v94 = vld [vmem:[%s2] sm:$0x1]
    %v96 = vperm.slane %v94, 0
    %v162 = vunpack.c.l.b16 %v25
    %v163 = vunpack.c.l.b16 %v26
    %v164 = vunpack.c.l.b16 %v27
    %v165 = vunpack.c.l.b16 %v28
    %v166 = vunpack.c.l.b16 %v29
    %v167 = vunpack.c.l.b16 %v30
    %v168 = vunpack.c.l.b16 %v31
    %v169 = vunpack.c.l.b16 %v32
    %v170 = vunpack.c.l.b16 %v33
    %v171 = vunpack.c.l.b16 %v34
    %v172 = vunpack.c.l.b16 %v35
    %v173 = vunpack.c.l.b16 %v36
    %v174 = vunpack.c.l.b16 %v37
    %v175 = vunpack.c.l.b16 %v38
    %v176 = vunpack.c.l.b16 %v39
    %v177 = vunpack.c.l.b16 %v40
    %v178 = vunpack.c.l.b16 %v41
    %v179 = vunpack.c.l.b16 %v42
    %v180 = vunpack.c.l.b16 %v43
    %v181 = vunpack.c.l.b16 %v44
    %v182 = vunpack.c.l.b16 %v45
    %v183 = vunpack.c.l.b16 %v46
    %v184 = vunpack.c.l.b16 %v47
    %v185 = vunpack.c.l.b16 %v48
    %v186 = vunpack.c.l.b16 %v49
    %v187 = vunpack.c.l.b16 %v50
    %v188 = vunpack.c.l.b16 %v51
    %v189 = vunpack.c.l.b16 %v52
    %v190 = vunpack.c.l.b16 %v53
    %v191 = vunpack.c.l.b16 %v54
    %v192 = vunpack.c.l.b16 %v55
    %v193 = vunpack.c.l.b16 %v56
    %v194 = vunpack.c.l.b16 %v57
    %v195 = vunpack.c.l.b16 %v58
    %v196 = vunpack.c.l.b16 %v59
    %v197 = vunpack.c.l.b16 %v60
    %v198 = vunpack.c.l.b16 %v61
    %v199 = vunpack.c.l.b16 %v62
    %v200 = vunpack.c.l.b16 %v63
    %v201 = vunpack.c.l.b16 %v64
    %v202 = vunpack.c.l.b16 %v65
    %v203 = vunpack.c.l.b16 %v66
    %v204 = vunpack.c.l.b16 %v67
    %v205 = vunpack.c.l.b16 %v68
    %v206 = vunpack.c.l.b16 %v69
    %v207 = vunpack.c.l.b16 %v70
    %v208 = vunpack.c.l.b16 %v71
    %v209 = vunpack.c.l.b16 %v72
    %v210 = vunpack.c.l.b16 %v73
    %v211 = vunpack.c.l.b16 %v74
    %v212 = vunpack.c.l.b16 %v75
    %v213 = vunpack.c.l.b16 %v76
    %v214 = vunpack.c.l.b16 %v77
    %v215 = vunpack.c.l.b16 %v78
    %v216 = vunpack.c.l.b16 %v79
    %v217 = vunpack.c.l.b16 %v80
    %v218 = vunpack.c.l.b16 %v81
    %v219 = vunpack.c.l.b16 %v82
    %v220 = vunpack.c.l.b16 %v83
    %v221 = vunpack.c.l.b16 %v84
    %v222 = vunpack.c.l.b16 %v85
    %v223 = vunpack.c.l.b16 %v86
    %v224 = vunpack.c.l.b16 %v87
    %v225 = vunpack.c.l.b16 %v88
    %v226 = vpack.c.b16 %v163, %v162
    %v227 = vpack.c.b16 %v165, %v164
    %v228 = vpack.c.b16 %v167, %v166
    %v229 = vpack.c.b16 %v169, %v168
    %v230 = vpack.c.b16 %v171, %v170
    %v231 = vpack.c.b16 %v173, %v172
    %v232 = vpack.c.b16 %v175, %v174
    %v233 = vpack.c.b16 %v177, %v176
    %v234 = vpack.c.b16 %v179, %v178
    %v235 = vpack.c.b16 %v181, %v180
    %v236 = vpack.c.b16 %v183, %v182
    %v237 = vpack.c.b16 %v185, %v184
    %v238 = vpack.c.b16 %v187, %v186
    %v239 = vpack.c.b16 %v189, %v188
    %v240 = vpack.c.b16 %v191, %v190
    %v241 = vpack.c.b16 %v193, %v192
    %v242 = vpack.c.b16 %v195, %v194
    %v243 = vpack.c.b16 %v197, %v196
    %v244 = vpack.c.b16 %v199, %v198
    %v245 = vpack.c.b16 %v201, %v200
    %v246 = vpack.c.b16 %v203, %v202
    %v247 = vpack.c.b16 %v205, %v204
    %v248 = vpack.c.b16 %v207, %v206
    %v249 = vpack.c.b16 %v209, %v208
    %v250 = vpack.c.b16 %v211, %v210
    %v251 = vpack.c.b16 %v213, %v212
    %v252 = vpack.c.b16 %v215, %v214
    %v253 = vpack.c.b16 %v217, %v216
    %v254 = vpack.c.b16 %v219, %v218
    %v255 = vpack.c.b16 %v221, %v220
    %v256 = vpack.c.b16 %v223, %v222
    %v257 = vpack.c.b16 %v225, %v224
    %v263 = vunpack.c.l.b16 %v89
    %v264 = vunpack.c.l.b16 %v90
    %v265 = vunpack.c.l.b16 %v91
    %v266 = vunpack.c.l.b16 %v92
    %v267 = vunpack.c.l.b16 %v93
    %v268 = vpack.c.b16 %v264, %v263
    %v269 = vpack.c.b16 %v266, %v265
    %v270 = vpack.c.b16 %v267, %v267
    %vm273 = vcmask 293888
    %v275 = vsel %vm273, %v226, 0
    %v278 = vsel %vm273, %v227, 0
    %v281 = vsel %vm273, %v228, 0
    %v284 = vsel %vm273, %v229, 0
    %v287 = vsel %vm273, %v230, 0
    %v290 = vsel %vm273, %v231, 0
    %v293 = vsel %vm273, %v232, 0
    %v296 = vsel %vm273, %v233, 0
    %v299 = vsel %vm273, %v234, 0
    %v302 = vsel %vm273, %v235, 0
    %v305 = vsel %vm273, %v236, 0
    %v308 = vsel %vm273, %v237, 0
    %v311 = vsel %vm273, %v238, 0
    %v314 = vsel %vm273, %v239, 0
    %v317 = vsel %vm273, %v240, 0
    %v320 = vsel %vm273, %v241, 0
    %v323 = vsel %vm273, %v242, 0
    %v326 = vsel %vm273, %v243, 0
    %v329 = vsel %vm273, %v244, 0
    %v332 = vsel %vm273, %v245, 0
    %v335 = vsel %vm273, %v246, 0
    %v338 = vsel %vm273, %v247, 0
    %v341 = vsel %vm273, %v248, 0
    %v344 = vsel %vm273, %v249, 0
    %v347 = vsel %vm273, %v250, 0
    %v350 = vsel %vm273, %v251, 0
    %v353 = vsel %vm273, %v252, 0
    %v356 = vsel %vm273, %v253, 0
    %v359 = vsel %vm273, %v254, 0
    %v362 = vsel %vm273, %v255, 0
    %v365 = vsel %vm273, %v256, 0
    %v368 = vsel %vm273, %v257, 0
    %vm370 = vcmask 1041408
    %v372 = vsel %vm370, %v270, 0
    %374 = vmatpush.bf16.msra.mxu0 0
    %375 = vmatpush.bf16.msra.mxu0 0
    %376 = vmatpush.bf16.msra.mxu0 0
    %377 = vmatpush.bf16.msra.mxu0 0
    %378 = vmatpush.bf16.msra.mxu0 0
    %379 = vmatpush.bf16.msra.mxu0 %v372
    %380 = vmatpush.bf16.msra.mxu0 %v269
    %381 = vmatpush.bf16.msra.mxu0 %v268
    %382 = vmatmul.bf16.gmra.mxu0 %v275
    %v383 = vpop.f32.mrf.mxu0
    %v384 = vadd.f32 %v96, %v383
    %v385 = vpop.f32.mrf.mxu0
    %v386 = vadd.f32 %v96, %v385
    %387 = vmatmul.bf16.gmra.mxu0 %v278
    %v388 = vpop.f32.mrf.mxu0
    %v389 = vadd.f32 %v96, %v388
    %v390 = vpop.f32.mrf.mxu0
    %v391 = vadd.f32 %v96, %v390
    %392 = vmatmul.bf16.gmra.mxu0 %v281
    %v393 = vpop.f32.mrf.mxu0
    %v394 = vadd.f32 %v96, %v393
    %v395 = vpop.f32.mrf.mxu0
    %v396 = vadd.f32 %v96, %v395
    %397 = vmatmul.bf16.gmra.mxu0 %v284
    %v398 = vpop.f32.mrf.mxu0
    %v399 = vadd.f32 %v96, %v398
    %v400 = vpop.f32.mrf.mxu0
    %v401 = vadd.f32 %v96, %v400
    %402 = vmatmul.bf16.gmra.mxu0 %v287
    %v403 = vpop.f32.mrf.mxu0
    %v404 = vadd.f32 %v96, %v403
    %v405 = vpop.f32.mrf.mxu0
    %v406 = vadd.f32 %v96, %v405
    %407 = vmatmul.bf16.gmra.mxu0 %v290
    %v408 = vpop.f32.mrf.mxu0
    %v409 = vadd.f32 %v96, %v408
    %v410 = vpop.f32.mrf.mxu0
    %v411 = vadd.f32 %v96, %v410
    %412 = vmatmul.bf16.gmra.mxu0 %v293
    %v413 = vpop.f32.mrf.mxu0
    %v414 = vadd.f32 %v96, %v413
    %v415 = vpop.f32.mrf.mxu0
    %v416 = vadd.f32 %v96, %v415
    %417 = vmatmul.bf16.gmra.mxu0 %v296
    %v418 = vpop.f32.mrf.mxu0
    %v419 = vadd.f32 %v96, %v418
    %v420 = vpop.f32.mrf.mxu0
    %v421 = vadd.f32 %v96, %v420
    %422 = vmatmul.bf16.gmra.mxu0 %v299
    %v423 = vpop.f32.mrf.mxu0
    %v424 = vadd.f32 %v96, %v423
    %v425 = vpop.f32.mrf.mxu0
    %v426 = vadd.f32 %v96, %v425
    %427 = vmatmul.bf16.gmra.mxu0 %v302
    %v428 = vpop.f32.mrf.mxu0
    %v429 = vadd.f32 %v96, %v428
    %v430 = vpop.f32.mrf.mxu0
    %v431 = vadd.f32 %v96, %v430
    %432 = vmatmul.bf16.gmra.mxu0 %v305
    %v433 = vpop.f32.mrf.mxu0
    %v434 = vadd.f32 %v96, %v433
    %v435 = vpop.f32.mrf.mxu0
    %v436 = vadd.f32 %v96, %v435
    %437 = vmatmul.bf16.gmra.mxu0 %v308
    %v438 = vpop.f32.mrf.mxu0
    %v439 = vadd.f32 %v96, %v438
    %v440 = vpop.f32.mrf.mxu0
    %v441 = vadd.f32 %v96, %v440
    %442 = vmatmul.bf16.gmra.mxu0 %v311
    %v443 = vpop.f32.mrf.mxu0
    %v444 = vadd.f32 %v96, %v443
    %v445 = vpop.f32.mrf.mxu0
    %v446 = vadd.f32 %v96, %v445
    %447 = vmatmul.bf16.gmra.mxu0 %v314
    %v448 = vpop.f32.mrf.mxu0
    %v449 = vadd.f32 %v96, %v448
    %v450 = vpop.f32.mrf.mxu0
    %v451 = vadd.f32 %v96, %v450
    %452 = vmatmul.bf16.gmra.mxu0 %v317
    %v453 = vpop.f32.mrf.mxu0
    %v454 = vadd.f32 %v96, %v453
    %v455 = vpop.f32.mrf.mxu0
    %v456 = vadd.f32 %v96, %v455
    %457 = vmatmul.bf16.gmra.mxu0 %v320
    %v458 = vpop.f32.mrf.mxu0
    %v459 = vadd.f32 %v96, %v458
    %v460 = vpop.f32.mrf.mxu0
    %v461 = vadd.f32 %v96, %v460
    %462 = vmatmul.bf16.gmra.mxu0 %v323
    %v463 = vpop.f32.mrf.mxu0
    %v464 = vadd.f32 %v96, %v463
    %v465 = vpop.f32.mrf.mxu0
    %v466 = vadd.f32 %v96, %v465
    %467 = vmatmul.bf16.gmra.mxu0 %v326
    %v468 = vpop.f32.mrf.mxu0
    %v469 = vadd.f32 %v96, %v468
    %v470 = vpop.f32.mrf.mxu0
    %v471 = vadd.f32 %v96, %v470
    %472 = vmatmul.bf16.gmra.mxu0 %v329
    %v473 = vpop.f32.mrf.mxu0
    %v474 = vadd.f32 %v96, %v473
    %v475 = vpop.f32.mrf.mxu0
    %v476 = vadd.f32 %v96, %v475
    %477 = vmatmul.bf16.gmra.mxu0 %v332
    %v478 = vpop.f32.mrf.mxu0
    %v479 = vadd.f32 %v96, %v478
    %v480 = vpop.f32.mrf.mxu0
    %v481 = vadd.f32 %v96, %v480
    %482 = vmatmul.bf16.gmra.mxu0 %v335
    %v483 = vpop.f32.mrf.mxu0
    %v484 = vadd.f32 %v96, %v483
    %v485 = vpop.f32.mrf.mxu0
    %v486 = vadd.f32 %v96, %v485
    %487 = vmatmul.bf16.gmra.mxu0 %v338
    %v488 = vpop.f32.mrf.mxu0
    %v489 = vadd.f32 %v96, %v488
    %v490 = vpop.f32.mrf.mxu0
    %v491 = vadd.f32 %v96, %v490
    %492 = vmatmul.bf16.gmra.mxu0 %v341
    %v493 = vpop.f32.mrf.mxu0
    %v494 = vadd.f32 %v96, %v493
    %v495 = vpop.f32.mrf.mxu0
    %v496 = vadd.f32 %v96, %v495
    %497 = vmatmul.bf16.gmra.mxu0 %v344
    %v498 = vpop.f32.mrf.mxu0
    %v499 = vadd.f32 %v96, %v498
    %v500 = vpop.f32.mrf.mxu0
    %v501 = vadd.f32 %v96, %v500
    %502 = vmatmul.bf16.gmra.mxu0 %v347
    %v503 = vpop.f32.mrf.mxu0
    %v504 = vadd.f32 %v96, %v503
    %v505 = vpop.f32.mrf.mxu0
    %v506 = vadd.f32 %v96, %v505
    %507 = vmatmul.bf16.gmra.mxu0 %v350
    %v508 = vpop.f32.mrf.mxu0
    %v509 = vadd.f32 %v96, %v508
    %v510 = vpop.f32.mrf.mxu0
    %v511 = vadd.f32 %v96, %v510
    %512 = vmatmul.bf16.gmra.mxu0 %v353
    %v513 = vpop.f32.mrf.mxu0
    %v514 = vadd.f32 %v96, %v513
    %v515 = vpop.f32.mrf.mxu0
    %v516 = vadd.f32 %v96, %v515
    %517 = vmatmul.bf16.gmra.mxu0 %v356
    %v518 = vpop.f32.mrf.mxu0
    %v519 = vadd.f32 %v96, %v518
    %v520 = vpop.f32.mrf.mxu0
    %v521 = vadd.f32 %v96, %v520
    %522 = vmatmul.bf16.gmra.mxu0 %v359
    %v523 = vpop.f32.mrf.mxu0
    %v524 = vadd.f32 %v96, %v523
    %v525 = vpop.f32.mrf.mxu0
    %v526 = vadd.f32 %v96, %v525
    %527 = vmatmul.bf16.gmra.mxu0 %v362
    %v528 = vpop.f32.mrf.mxu0
    %v529 = vadd.f32 %v96, %v528
    %v530 = vpop.f32.mrf.mxu0
    %v531 = vadd.f32 %v96, %v530
    %532 = vmatmul.bf16.gmra.mxu0 %v365
    %v533 = vpop.f32.mrf.mxu0
    %v534 = vadd.f32 %v96, %v533
    %v535 = vpop.f32.mrf.mxu0
    %v536 = vadd.f32 %v96, %v535
    %537 = vmatmul.bf16.gmra.mxu0 %v368
    %v538 = vpop.f32.mrf.mxu0
    %v539 = vadd.f32 %v96, %v538
    %v540 = vpop.f32.mrf.mxu0
    %v541 = vadd.f32 %v96, %v540
    %542 = vdwg.mxu0
    %v543 = vmax.f32 %v384, 0.0
    %v544 = vmax.f32 %v386, 0.0
    %v545 = vmax.f32 %v389, 0.0
    %v546 = vmax.f32 %v391, 0.0
    %v547 = vmax.f32 %v394, 0.0
    %v548 = vmax.f32 %v396, 0.0
    %v549 = vmax.f32 %v399, 0.0
    %v550 = vmax.f32 %v401, 0.0
    %v551 = vmax.f32 %v404, 0.0
    %v552 = vmax.f32 %v406, 0.0
    %v553 = vmax.f32 %v409, 0.0
    %v554 = vmax.f32 %v411, 0.0
    %v555 = vmax.f32 %v414, 0.0
    %v556 = vmax.f32 %v416, 0.0
    %v557 = vmax.f32 %v419, 0.0
    %v558 = vmax.f32 %v421, 0.0
    %v559 = vmax.f32 %v424, 0.0
    %v560 = vmax.f32 %v426, 0.0
    %v561 = vmax.f32 %v429, 0.0
    %v562 = vmax.f32 %v431, 0.0
    %v563 = vmax.f32 %v434, 0.0
    %v564 = vmax.f32 %v436, 0.0
    %v565 = vmax.f32 %v439, 0.0
    %v566 = vmax.f32 %v441, 0.0
    %v567 = vmax.f32 %v444, 0.0
    %v568 = vmax.f32 %v446, 0.0
    %v569 = vmax.f32 %v449, 0.0
    %v570 = vmax.f32 %v451, 0.0
    %v571 = vmax.f32 %v454, 0.0
    %v572 = vmax.f32 %v456, 0.0
    %v573 = vmax.f32 %v459, 0.0
    %v574 = vmax.f32 %v461, 0.0
    %v575 = vmax.f32 %v464, 0.0
    %v576 = vmax.f32 %v466, 0.0
    %v577 = vmax.f32 %v469, 0.0
    %v578 = vmax.f32 %v471, 0.0
    %v579 = vmax.f32 %v474, 0.0
    %v580 = vmax.f32 %v476, 0.0
    %v581 = vmax.f32 %v479, 0.0
    %v582 = vmax.f32 %v481, 0.0
    %v583 = vmax.f32 %v484, 0.0
    %v584 = vmax.f32 %v486, 0.0
    %v585 = vmax.f32 %v489, 0.0
    %v586 = vmax.f32 %v491, 0.0
    %v587 = vmax.f32 %v494, 0.0
    %v588 = vmax.f32 %v496, 0.0
    %v589 = vmax.f32 %v499, 0.0
    %v590 = vmax.f32 %v501, 0.0
    %v591 = vmax.f32 %v504, 0.0
    %v592 = vmax.f32 %v506, 0.0
    %v593 = vmax.f32 %v509, 0.0
    %v594 = vmax.f32 %v511, 0.0
    %v595 = vmax.f32 %v514, 0.0
    %v596 = vmax.f32 %v516, 0.0
    %v597 = vmax.f32 %v519, 0.0
    %v598 = vmax.f32 %v521, 0.0
    %v599 = vmax.f32 %v524, 0.0
    %v600 = vmax.f32 %v526, 0.0
    %v601 = vmax.f32 %v529, 0.0
    %v602 = vmax.f32 %v531, 0.0
    %v603 = vmax.f32 %v534, 0.0
    %v604 = vmax.f32 %v536, 0.0
    %v605 = vmax.f32 %v539, 0.0
    %v606 = vmax.f32 %v541, 0.0
    %v607 = vadd.f32 %v543, %v544
    %v608 = vadd.f32 %v607, %v545
    %v609 = vadd.f32 %v608, %v546
    %v610 = vadd.f32 %v609, %v547
    %v611 = vadd.f32 %v610, %v548
    %v612 = vadd.f32 %v611, %v549
    %v613 = vadd.f32 %v612, %v550
    %v614 = vadd.f32 %v613, %v551
    %v615 = vadd.f32 %v614, %v552
    %v616 = vadd.f32 %v615, %v553
    %v617 = vadd.f32 %v616, %v554
    %v618 = vadd.f32 %v617, %v555
    %v619 = vadd.f32 %v618, %v556
    %v620 = vadd.f32 %v619, %v557
    %v621 = vadd.f32 %v620, %v558
    %v622 = vadd.f32 %v621, %v559
    %v623 = vadd.f32 %v622, %v560
    %v624 = vadd.f32 %v623, %v561
    %v625 = vadd.f32 %v624, %v562
    %v626 = vadd.f32 %v625, %v563
    %v627 = vadd.f32 %v626, %v564
    %v628 = vadd.f32 %v627, %v565
    %v629 = vadd.f32 %v628, %v566
    %v630 = vadd.f32 %v629, %v567
    %v631 = vadd.f32 %v630, %v568
    %v632 = vadd.f32 %v631, %v569
    %v633 = vadd.f32 %v632, %v570
    %v634 = vadd.f32 %v633, %v571
    %v635 = vadd.f32 %v634, %v572
    %v636 = vadd.f32 %v635, %v573
    %v637 = vadd.f32 %v636, %v574
    %v638 = vrot.slane %v637, 4
    %v639 = vadd.f32 %v637, %v638
    %v640 = vrot.slane %v639, 2
    %v641 = vadd.f32 %v639, %v640
    %v642 = vrot.slane %v641, 1
    %v643 = vadd.f32 %v641, %v642
    %v644 = vadd.f32 %v575, %v576
    %v645 = vadd.f32 %v644, %v577
    %v646 = vadd.f32 %v645, %v578
    %v647 = vadd.f32 %v646, %v579
    %v648 = vadd.f32 %v647, %v580
    %v649 = vadd.f32 %v648, %v581
    %v650 = vadd.f32 %v649, %v582
    %v651 = vadd.f32 %v650, %v583
    %v652 = vadd.f32 %v651, %v584
    %v653 = vadd.f32 %v652, %v585
    %v654 = vadd.f32 %v653, %v586
    %v655 = vadd.f32 %v654, %v587
    %v656 = vadd.f32 %v655, %v588
    %v657 = vadd.f32 %v656, %v589
    %v658 = vadd.f32 %v657, %v590
    %v659 = vadd.f32 %v658, %v591
    %v660 = vadd.f32 %v659, %v592
    %v661 = vadd.f32 %v660, %v593
    %v662 = vadd.f32 %v661, %v594
    %v663 = vadd.f32 %v662, %v595
    %v664 = vadd.f32 %v663, %v596
    %v665 = vadd.f32 %v664, %v597
    %v666 = vadd.f32 %v665, %v598
    %v667 = vadd.f32 %v666, %v599
    %v668 = vadd.f32 %v667, %v600
    %v669 = vadd.f32 %v668, %v601
    %v670 = vadd.f32 %v669, %v602
    %v671 = vadd.f32 %v670, %v603
    %v672 = vadd.f32 %v671, %v604
    %v673 = vadd.f32 %v672, %v605
    %v674 = vadd.f32 %v673, %v606
    %v675 = vrot.slane %v674, 4
    %v676 = vadd.f32 %v674, %v675
    %v677 = vrot.slane %v676, 2
    %v678 = vadd.f32 %v676, %v677
    %v679 = vrot.slane %v678, 1
    %v680 = vadd.f32 %v678, %v679
    %v681 = vmul.f32 %v643, 0.00390625
    %v682 = vmul.f32 %v680, 0.00390625
    %vm685 = vcmask 1041409
    %v686 = vsel %vm685, %v682, %v681
    %688 = vst [vmem:[#allocation2] sm:$0x3] %v686
    %v689 = vpack.c.bf16 %v681, %v681
    %v690 = vpack.c.bf16 %v682, %v682
    %v691 = vld [vmem:[%s3] sm:$0xf]
    %v692 = vld [vmem:[%s3 + $0x4] sm:$0xf]
    %v693 = vld [vmem:[%s3 + $0x8] sm:$0xf]
    %v694 = vld [vmem:[%s3 + $0xc] sm:$0xf]
    %v695 = vld [vmem:[%s3 + $0x10] sm:$0xf]
    %v696 = vld [vmem:[%s3 + $0x14] sm:$0xf]
    %v697 = vld [vmem:[%s3 + $0x18] sm:$0xf]
    %v698 = vld [vmem:[%s3 + $0x1c] sm:$0xf]
    %v699 = vld [vmem:[%s3 + $0x20] sm:$0xf]
    %v700 = vld [vmem:[%s3 + $0x24] sm:$0xf]
    %v701 = vld [vmem:[%s3 + $0x28] sm:$0xf]
    %v702 = vld [vmem:[%s3 + $0x2c] sm:$0xf]
    %v703 = vld [vmem:[%s3 + $0x30] sm:$0xf]
    %v704 = vld [vmem:[%s3 + $0x34] sm:$0xf]
    %v705 = vld [vmem:[%s3 + $0x38] sm:$0xf]
    %v706 = vld [vmem:[%s3 + $0x3c] sm:$0xf]
    %v707 = vld [vmem:[%s4] sm:$0x1]
    %v709 = vperm.slane %v707, 0
    %v713 = vunpack.c.l.b16 %v689
    %v714 = vunpack.c.l.b16 %v690
    %v715 = vsel %vm685, %v714, %v713
    %v716 = vpack.c.b16 %v715, %v715
    %v734 = vunpack.c.l.b16 %v691
    %v735 = vunpack.c.l.b16 %v692
    %v736 = vunpack.c.l.b16 %v693
    %v737 = vunpack.c.l.b16 %v694
    %v738 = vunpack.c.l.b16 %v695
    %v739 = vunpack.c.l.b16 %v696
    %v740 = vunpack.c.l.b16 %v697
    %v741 = vunpack.c.l.b16 %v698
    %v742 = vunpack.c.l.b16 %v699
    %v743 = vunpack.c.l.b16 %v700
    %v744 = vunpack.c.l.b16 %v701
    %v745 = vunpack.c.l.b16 %v702
    %v746 = vunpack.c.l.b16 %v703
    %v747 = vunpack.c.l.b16 %v704
    %v748 = vunpack.c.l.b16 %v705
    %v749 = vunpack.c.l.b16 %v706
    %v750 = vpack.c.b16 %v735, %v734
    %v751 = vpack.c.b16 %v737, %v736
    %v752 = vpack.c.b16 %v739, %v738
    %v753 = vpack.c.b16 %v741, %v740
    %v754 = vpack.c.b16 %v743, %v742
    %v755 = vpack.c.b16 %v745, %v744
    %v756 = vpack.c.b16 %v747, %v746
    %v757 = vpack.c.b16 %v749, %v748
    %766 = vmatpush.bf16.msra.mxu0 %v757
    %767 = vmatpush.bf16.msra.mxu0 %v756
    %768 = vmatpush.bf16.msra.mxu0 %v755
    %769 = vmatpush.bf16.msra.mxu0 %v754
    %770 = vmatpush.bf16.msra.mxu0 %v753
    %771 = vmatpush.bf16.msra.mxu0 %v752
    %772 = vmatpush.bf16.msra.mxu0 %v751
    %773 = vmatpush.bf16.msra.mxu0 %v750
    %774 = vmatmul.bf16.gmra.mxu0 %v716
    %v775 = vpop.f32.mrf.mxu0
    %v776 = vadd.f32 %v709, %v775
    %v777 = vpop.f32.mrf.mxu0
    %778 = vdwg.mxu0
    %779 = vst [vmem:[#allocation4] sm:$0x3] %v776
    // Predicated region
    $region22: #{tpu_custom_call.1} parent=1 // pred_check
      _
    $region23: #{tpu_custom_call.1} parent=1 // pred_check_branch
      %781 = sbr.rel (0) target = $region25
    $region24: #{tpu_custom_call.1} parent=1 // pred_region
      %783 = vsyncadd [#allocation3], 0
      %s785 = sshll.u32 [#allocation2], 4
      %s786 = int_to_ptr.vmem [resolvable:$true] %s785
      %s787 = sshll.u32 %s5, 4
      %s788 = int_to_ptr.hbm [resolvable:$true] %s787
      %790 = dma.vmem_to_hbm [thread:$0]  %s786, 32, %s788, [#allocation3]
    $region25: #{tpu_custom_call.1} parent=1 // pred_fallthru
      _
    // Predicated region
    $region26: #{tpu_custom_call.1} parent=1 // pred_check
      _
    $region27: #{tpu_custom_call.1} parent=1 // pred_check_branch
      %792 = sbr.rel (0) target = $region29
    $region28: #{tpu_custom_call.1} parent=1 // pred_region
      %794 = vsyncadd [#allocation5], 0
      %s796 = sshll.u32 [#allocation4], 4
      %s797 = int_to_ptr.vmem [resolvable:$true] %s796
      %s798 = sshll.u32 %s6, 4
      %s799 = int_to_ptr.hbm [resolvable:$true] %s798
      %801 = dma.vmem_to_hbm [thread:$0]  %s797, 32, %s799, [#allocation5]
    $region29: #{tpu_custom_call.1} parent=1 // pred_fallthru
      _
    // Predicated region
    $region30: #{tpu_custom_call.1} parent=1 // pred_check
      _
    $region31: #{tpu_custom_call.1} parent=1 // pred_check_branch
      %803 = sbr.rel (0) target = $region33
    $region32: #{tpu_custom_call.1} parent=1 // pred_region
      %805 = dma.done [#allocation3], 32
    $region33: #{tpu_custom_call.1} parent=1 // pred_fallthru
      _
    // Predicated region
    $region34: #{tpu_custom_call.1} parent=1 // pred_check
      _
    $region35: #{tpu_custom_call.1} parent=1 // pred_check_branch
      %807 = sbr.rel (0) target = $region37
    $region36: #{tpu_custom_call.1} parent=1 // pred_region
      %809 = dma.done [#allocation5], 32
    $region37: #{tpu_custom_call.1} parent=1 // pred_fallthru
      _
    %810 = vsyncpa [#allocation3], 1
    %811 = vsyncpa [#allocation5], 1

</llo_original>
